<compile_context>
chip_gen: v7x
topology: tpu7x:2x2x1
jax: 0.10.0
libtpu: 0.0.40
codegen_flags: <defaults>
</compile_context>

<pallas_src>
import functools
import math

import jax
import jax.numpy as jnp
from jax.experimental import pallas as pl
from jax.experimental.pallas import tpu as pltpu


_LANE = 128
# Everything at or below this total size goes through the single-launch fused
# kernel (all tensors resident in VMEM at once, no pipelining needed).
_FUSED_VMEM_BUDGET_BYTES = 8 * 1024 * 1024
# Per-step block target (f32 bytes) for the tiled streaming path.  ~2 MiB
# blocks (double-buffered input + f32 accumulator ~= 6 MiB VMEM) sit near the
# measured HBM-roofline knee on v5e/v6e/v7x while staying well inside every
# generation's default scoped-VMEM limit.
_TILE_TARGET_BYTES = 2 * 1024 * 1024


# ---------------------------------------------------------------------------
# Fused single-block kernel: one launch for z (sum of squares) + all log_s.
# ---------------------------------------------------------------------------
def _fused_sums_kernel(num_log_s, *refs):
    # refs = (z_ref, s_ref_0 .. s_ref_{n-1}, zsq_out_ref, logs_out_ref)
    z_ref = refs[0]
    s_refs = refs[1:1 + num_log_s]
    zsq_out = refs[1 + num_log_s]
    logs_out = refs[2 + num_log_s]

    z = z_ref[...].astype(jnp.float32)
    zsq_out[...] = jnp.sum(z * z).reshape(1, 1)

    total = jnp.zeros((1, 1), jnp.float32)
    for s_ref in s_refs:
        s = s_ref[...].astype(jnp.float32)
        total = total + jnp.sum(s).reshape(1, 1)
    logs_out[...] = total


def _fused_sums(z, log_s_list):
    """One pallas_call returning (sum(z*z), sum over all log_s) as f32 scalars."""
    kernel = functools.partial(_fused_sums_kernel, len(log_s_list))
    zsq, logs = pl.pallas_call(
        kernel,
        out_shape=(jax.ShapeDtypeStruct((1, 1), jnp.float32),
                   jax.ShapeDtypeStruct((1, 1), jnp.float32)),
    )(z, *log_s_list)
    return zsq[0, 0], logs[0, 0]


# ---------------------------------------------------------------------------
# Tiled streaming reduction for large tensors.
# ---------------------------------------------------------------------------
def _tiled_reduce_kernel(x_ref, o_ref, acc_ref, *, square, valid_t):
    i = pl.program_id(0)

    @pl.when(i == 0)
    def _():
        acc_ref[...] = jnp.zeros_like(acc_ref)

    blk = x_ref[...].astype(jnp.float32)          # (..., T_BLK)
    t_blk = blk.shape[-1]
    col = i * t_blk + jax.lax.broadcasted_iota(jnp.int32, blk.shape, blk.ndim - 1)
    v = blk * blk if square else blk
    v = jnp.where(col < valid_t, v, 0.0)          # mask ragged / OOB tail
    # Pure element-wise accumulation: no cross-lane XLU work in the hot loop.
    acc_ref[...] += v

    @pl.when(i == pl.num_programs(0) - 1)
    def _():
        # Single epilogue cross-lane reduce to the scalar output.
        o_ref[...] = jnp.sum(acc_ref[...]).reshape(1, 1)


def _tiled_reduce(x, *, square):
    """sum(x) or sum(x*x) as an f32 scalar, streaming x tile-by-tile from HBM."""
    if x.ndim == 1:
        x = x.reshape(1, -1)                      # free: just adds a leading 1
    lead = x.shape[:-1]
    t = x.shape[-1]
    lead_elems = math.prod(lead) if lead else 1

    # Lane-aligned block along the trailing axis targeting ~_TILE_TARGET_BYTES.
    t_blk = max(_LANE,
                (_TILE_TARGET_BYTES // (4 * lead_elems)) // _LANE * _LANE)
    if t <= t_blk:
        t_blk = t                                 # full trailing dim, grid of 1
    grid = pl.cdiv(t, t_blk)

    block_shape = lead + (t_blk,)
    index_map = lambda i: (0,) * len(lead) + (i,)

    kernel = functools.partial(_tiled_reduce_kernel, square=square, valid_t=t)
    out = pl.pallas_call(
        kernel,
        out_shape=jax.ShapeDtypeStruct((1, 1), jnp.float32),
        grid_spec=pltpu.PrefetchScalarGridSpec(
            num_scalar_prefetch=0,
            grid=(grid,),
            in_specs=[pl.BlockSpec(block_shape, index_map)],
            out_specs=pl.BlockSpec((1, 1), lambda i: (0, 0)),
            scratch_shapes=[pltpu.VMEM(block_shape, jnp.float32)],
        ),
        compiler_params=pltpu.CompilerParams(
            dimension_semantics=("arbitrary",)),
    )(x)
    return out[0, 0]


# ---------------------------------------------------------------------------
# Loss wrapper (mirrors WaveGlowLoss.forward).
# ---------------------------------------------------------------------------
def waveglow_loss(model_output, sigma: float = 1.0) -> jax.Array:
    z, log_s_list, log_det_W_list = model_output

    total_bytes = z.size * z.dtype.itemsize + sum(
        s.size * s.dtype.itemsize for s in log_s_list)

    if total_bytes <= _FUSED_VMEM_BUDGET_BYTES:
        # Single kernel launch for all reductions.
        z_sq_sum, log_s_total = _fused_sums(z, log_s_list)
    else:
        # Large tensors: per-tensor tiled streaming reductions (launch overhead
        # is negligible at these sizes).
        z_sq_sum = _tiled_reduce(z, square=True)
        log_s_total = jnp.float32(0.0)
        for s in log_s_list:
            log_s_total = log_s_total + _tiled_reduce(s, square=False)

    log_det_W_total = jnp.float32(0.0)
    for w in log_det_W_list:
        log_det_W_total = log_det_W_total + jnp.asarray(w, jnp.float32)

    loss = z_sq_sum / (2.0 * sigma * sigma) - log_s_total - log_det_W_total
    return loss / (z.shape[0] * z.shape[1] * z.shape[2])


def _reference_loss(model_output, sigma: float = 1.0) -> jax.Array:
    """Pure-JAX reference mirroring the PyTorch module exactly."""
    z, log_s_list, log_det_W_list = model_output
    log_s_total = sum(jnp.sum(ls.astype(jnp.float32)) for ls in log_s_list)
    log_det_W_total = sum(jnp.asarray(w, jnp.float32) for w in log_det_W_list)
    loss = (jnp.sum(z.astype(jnp.float32) ** 2) / (2.0 * sigma * sigma)
            - log_s_total - log_det_W_total)
    return loss / (z.shape[0] * z.shape[1] * z.shape[2])


if __name__ == "__main__":
    key = jax.random.PRNGKey(0)
    k_z, k_s0, k_s1, k_s2, k_w, k_big = jax.random.split(key, 6)

    # z: (batch, channels, time) — WaveGlow's remaining-channel latent.
    B, C, T = 2, 4, 16
    z = jax.random.normal(k_z, (B, C, T), dtype=jnp.float32)

    # log_s tensors from the affine coupling layers (channel counts vary).
    log_s_list = [
        jax.random.normal(k_s0, (B, 2, T), dtype=jnp.float32) * 0.1,
        jax.random.normal(k_s1, (B, 4, T), dtype=jnp.float32) * 0.1,
        jax.random.normal(k_s2, (B, 6, T), dtype=jnp.float32) * 0.1,
    ]

    # log_det_W scalars from the invertible 1x1 convolutions.
    w_vals = jax.random.normal(k_w, (3,), dtype=jnp.float32) * 0.5
    log_det_W_list = [w_vals[0], w_vals[1], w_vals[2]]

    model_output = (z, log_s_list, log_det_W_list)

    loss = jax.block_until_ready(waveglow_loss(model_output, sigma=1.0))
    ref = jax.block_until_ready(_reference_loss(model_output, sigma=1.0))
    assert jnp.allclose(loss, ref, rtol=1e-5, atol=1e-5), (loss, ref)

    # Also exercise the tiled (large-tensor) path: multi-step grid along the
    # trailing axis plus ragged-tail masking (10000 is not a multiple of 128).
    big = jax.random.normal(k_big, (8, 8, 10000), dtype=jnp.float32)
    got_sq = jax.block_until_ready(_tiled_reduce(big, square=True))
    got_sum = jax.block_until_ready(_tiled_reduce(big, square=False))
    ref_sq = jnp.sum(big * big)
    ref_sum = jnp.sum(big)
    assert jnp.allclose(got_sq, ref_sq, rtol=1e-4, atol=1.0), (got_sq, ref_sq)
    assert jnp.allclose(got_sum, ref_sum, rtol=1e-4, atol=1.0), (got_sum, ref_sum)

    print("KERNEL_OK")
</pallas_src>

<mosaic_0001>
module attributes {stable_mosaic.version = 11 : i64} {
  func.func @_fused_sums_kernel(%arg0: memref<2x4x16xf32, #tpu.memory_space<vmem>>, %arg1: memref<2x2x16xf32, #tpu.memory_space<vmem>>, %arg2: memref<2x4x16xf32, #tpu.memory_space<vmem>>, %arg3: memref<2x6x16xf32, #tpu.memory_space<vmem>>, %arg4: memref<1x1xf32, #tpu.memory_space<vmem>>, %arg5: memref<1x1xf32, #tpu.memory_space<vmem>>) attributes {dimension_semantics = [], scalar_prefetch = 0 : i64, scratch_operands = 0 : i64, tpu.core_type = #tpu.core_type<tc>} {
    %c0 = arith.constant 0 : index
    %c0_0 = arith.constant 0 : index
    %c0_1 = arith.constant 0 : index
    %0 = vector.load %arg0[%c0, %c0_0, %c0_1] : memref<2x4x16xf32, #tpu.memory_space<vmem>>, vector<2x4x16xf32>
    %1 = arith.mulf %0, %0 : vector<2x4x16xf32>
    %2 = vector.shape_cast %1 : vector<2x4x16xf32> to vector<1x2x4x16xf32>
    %cst = arith.constant dense<0.000000e+00> : vector<1xf32>
    %3 = vector.multi_reduction <add>, %2, %cst [1, 2, 3] : vector<1x2x4x16xf32> to vector<1xf32>
    %4 = vector.shape_cast %3 : vector<1xf32> to vector<1x1x1x1xf32>
    %5 = vector.extract %4[0, 0, 0, 0] : f32 from vector<1x1x1x1xf32>
    %6 = vector.broadcast %5 : f32 to vector<1x1xf32>
    %c0_2 = arith.constant 0 : index
    %c0_3 = arith.constant 0 : index
    %7 = vector.load %arg4[%c0_2, %c0_3] : memref<1x1xf32, #tpu.memory_space<vmem>>, vector<1x1xf32>
    tpu.vector_store %arg4[%c0_2, %c0_3], %6 {strides = array<i32>} : memref<1x1xf32, #tpu.memory_space<vmem>>, vector<1x1xf32>,
    %cst_4 = arith.constant 0.000000e+00 : f32
    %8 = vector.broadcast %cst_4 : f32 to vector<1x1xf32>
    %c0_5 = arith.constant 0 : index
    %c0_6 = arith.constant 0 : index
    %c0_7 = arith.constant 0 : index
    %9 = vector.load %arg1[%c0_5, %c0_6, %c0_7] : memref<2x2x16xf32, #tpu.memory_space<vmem>>, vector<2x2x16xf32>
    %10 = vector.shape_cast %9 : vector<2x2x16xf32> to vector<1x2x2x16xf32>
    %cst_8 = arith.constant dense<0.000000e+00> : vector<1xf32>
    %11 = vector.multi_reduction <add>, %10, %cst_8 [1, 2, 3] : vector<1x2x2x16xf32> to vector<1xf32>
    %12 = vector.shape_cast %11 : vector<1xf32> to vector<1x1x1x1xf32>
    %13 = vector.extract %12[0, 0, 0, 0] : f32 from vector<1x1x1x1xf32>
    %14 = vector.broadcast %13 : f32 to vector<1x1xf32>
    %15 = arith.addf %8, %14 : vector<1x1xf32>
    %c0_9 = arith.constant 0 : index
    %c0_10 = arith.constant 0 : index
    %c0_11 = arith.constant 0 : index
    %16 = vector.load %arg2[%c0_9, %c0_10, %c0_11] : memref<2x4x16xf32, #tpu.memory_space<vmem>>, vector<2x4x16xf32>
    %17 = vector.shape_cast %16 : vector<2x4x16xf32> to vector<1x2x4x16xf32>
    %cst_12 = arith.constant dense<0.000000e+00> : vector<1xf32>
    %18 = vector.multi_reduction <add>, %17, %cst_12 [1, 2, 3] : vector<1x2x4x16xf32> to vector<1xf32>
    %19 = vector.shape_cast %18 : vector<1xf32> to vector<1x1x1x1xf32>
    %20 = vector.extract %19[0, 0, 0, 0] : f32 from vector<1x1x1x1xf32>
    %21 = vector.broadcast %20 : f32 to vector<1x1xf32>
    %22 = arith.addf %15, %21 : vector<1x1xf32>
    %c0_13 = arith.constant 0 : index
    %c0_14 = arith.constant 0 : index
    %c0_15 = arith.constant 0 : index
    %23 = vector.load %arg3[%c0_13, %c0_14, %c0_15] : memref<2x6x16xf32, #tpu.memory_space<vmem>>, vector<2x6x16xf32>
    %24 = vector.shape_cast %23 : vector<2x6x16xf32> to vector<1x2x6x16xf32>
    %cst_16 = arith.constant dense<0.000000e+00> : vector<1xf32>
    %25 = vector.multi_reduction <add>, %24, %cst_16 [1, 2, 3] : vector<1x2x6x16xf32> to vector<1xf32>
    %26 = vector.shape_cast %25 : vector<1xf32> to vector<1x1x1x1xf32>
    %27 = vector.extract %26[0, 0, 0, 0] : f32 from vector<1x1x1x1xf32>
    %28 = vector.broadcast %27 : f32 to vector<1x1xf32>
    %29 = arith.addf %22, %28 : vector<1x1xf32>
    %c0_17 = arith.constant 0 : index
    %c0_18 = arith.constant 0 : index
    %30 = vector.load %arg5[%c0_17, %c0_18] : memref<1x1xf32, #tpu.memory_space<vmem>>, vector<1x1xf32>
    tpu.vector_store %arg5[%c0_17, %c0_18], %29 {strides = array<i32>} : memref<1x1xf32, #tpu.memory_space<vmem>>, vector<1x1xf32>,
    return
  }
}

</mosaic_0001>

<llo_original>
// kernel: tpu_custom_call.1
$region0: #{tpu_custom_call.1}
  #allocation0 [shape = 'u32[]', space=smem, size = 0x4, offset = 0x4, fixed_abs, tag = 'smem constant byte address 0x4 - core index']
  #allocation1 [shape = 'u32[144,128]{1,0:T(1,128)}', space=vmem, size = 0x12000, scoped, tag = 'internal scratch']
  %s0 = inlined_call_operand.vmem [shape: f32[2,4,16], index: 0, kind: input, shape index: {}]
  %s1 = inlined_call_operand.vmem [shape: f32[2,2,16], index: 1, kind: input, shape index: {}]
  %s2 = inlined_call_operand.vmem [shape: f32[2,4,16], index: 2, kind: input, shape index: {}]
  %s3 = inlined_call_operand.vmem [shape: f32[2,6,16], index: 3, kind: input, shape index: {}]
  %s4 = inlined_call_operand.hbm [shape: f32[1,1], index: 4, kind: output, shape index: {0}]
  %s5 = inlined_call_operand.hbm [shape: f32[1,1], index: 5, kind: output, shape index: {1}]
  %6 = xla_tuple %s4, %s5
  %s7 = sld [smem:[#allocation0]]
  $region34: #{tpu_custom_call.1} parent=0
    _
  %s9 = ssub.s32 1, %s7
  %s10 = scalar_select 0, %s9, %s7
  $region1: #{tpu_custom_call.1} parent=0
    #allocation2 [shape = 'u8[512]{0}', space=vmem, size = 0x400, scoped, tag = 'output window, operand 0, single buffered']
    #allocation3 [shape = 's32[1]{0}', space=sflag, size = 0x4, scoped, tag = 'scoped memory for tpu_custom_call.1']
    #allocation4 [shape = 'u8[512]{0}', space=vmem, size = 0x400, scoped, tag = 'output window, operand 1, single buffered']
    #allocation5 [shape = 's32[1]{0}', space=sflag, size = 0x4, scoped, tag = 'scoped memory for tpu_custom_call.1']
    %11 = vsyncpa [#allocation3], 0
    %12 = vsyncpa [#allocation5], 0
    // Predicated region
    $region2: #{tpu_custom_call.1} parent=1 // pred_check
      _
    $region3: #{tpu_custom_call.1} parent=1 // pred_check_branch
      %14 = sbr.rel (0) target = $region5
    $region4: #{tpu_custom_call.1} parent=1 // pred_region
      _
    $region5: #{tpu_custom_call.1} parent=1 // pred_fallthru
      _
    // Predicated region
    $region6: #{tpu_custom_call.1} parent=1 // pred_check
      _
    $region7: #{tpu_custom_call.1} parent=1 // pred_check_branch
      %16 = sbr.rel (0) target = $region9
    $region8: #{tpu_custom_call.1} parent=1 // pred_region
      _
    $region9: #{tpu_custom_call.1} parent=1 // pred_fallthru
      _
    // Predicated region
    $region10: #{tpu_custom_call.1} parent=1 // pred_check
      _
    $region11: #{tpu_custom_call.1} parent=1 // pred_check_branch
      %18 = sbr.rel (0) target = $region13
    $region12: #{tpu_custom_call.1} parent=1 // pred_region
      _
    $region13: #{tpu_custom_call.1} parent=1 // pred_fallthru
      _
    // Predicated region
    $region14: #{tpu_custom_call.1} parent=1 // pred_check
      _
    $region15: #{tpu_custom_call.1} parent=1 // pred_check_branch
      %20 = sbr.rel (0) target = $region17
    $region16: #{tpu_custom_call.1} parent=1 // pred_region
      _
    $region17: #{tpu_custom_call.1} parent=1 // pred_fallthru
      _
    %v21 = vld [vmem:[%s0] sm:$0xf]
    %v22 = vld [vmem:[%s0 + $0x4] sm:$0xf]
    %v23 = vmul.f32 %v21, %v21
    %v24 = vmul.f32 %v22, %v22
    %vm25 = vcmask 125952
    %v26 = vsel %vm25, %v23, 0.0
    %v27 = vsel %vm25, %v24, 0.0
    %v28 = vadd.f32 %v26, %v27
    %29 = vadd.xlane.f32.xlu0 %v28
    %v30 = vpop.xlane.xlu0 %29
    %v31 = vrot.slane %v30, 4
    %v32 = vadd.f32 %v30, %v31
    %v33 = vrot.slane %v32, 2
    %v34 = vadd.f32 %v32, %v33
    %v35 = vrot.slane %v34, 1
    %v36 = vadd.f32 %v34, %v35
    %s37 = vtos %v36
    %v38 = vstv %s37
    %vm39 = vcmask 0
    %40 = vst.msk [vmem:[#allocation2] sm:$0x1] %vm39, %v38
    %v41 = vld [vmem:[%s1] sm:$0x3]
    %v42 = vld [vmem:[%s1 + $0x2] sm:$0x3]
    %vm43 = vcmask 123904
    %v44 = vsel %vm43, %v41, 0.0
    %v45 = vsel %vm43, %v42, 0.0
    %v46 = vadd.f32 %v44, %v45
    %47 = vadd.xlane.f32.xlu0 %v46
    %v48 = vpop.xlane.xlu0 %47
    %v49 = vrot.slane %v48, 4
    %v50 = vadd.f32 %v48, %v49
    %v51 = vrot.slane %v50, 2
    %v52 = vadd.f32 %v50, %v51
    %v53 = vrot.slane %v52, 1
    %v54 = vadd.f32 %v52, %v53
    %s55 = vtos %v54
    %v56 = vstv %s55
    %v57 = vadd.f32 %v56, 0.0
    %v58 = vld [vmem:[%s2] sm:$0xf]
    %v59 = vld [vmem:[%s2 + $0x4] sm:$0xf]
    %v60 = vsel %vm25, %v58, 0.0
    %v61 = vsel %vm25, %v59, 0.0
    %v62 = vadd.f32 %v60, %v61
    %63 = vadd.xlane.f32.xlu0 %v62
    %v64 = vpop.xlane.xlu0 %63
    %v65 = vrot.slane %v64, 4
    %v66 = vadd.f32 %v64, %v65
    %v67 = vrot.slane %v66, 2
    %v68 = vadd.f32 %v66, %v67
    %v69 = vrot.slane %v68, 1
    %v70 = vadd.f32 %v68, %v69
    %s71 = vtos %v70
    %v72 = vstv %s71
    %v73 = vadd.f32 %v57, %v72
    %v74 = vld [vmem:[%s3] sm:$0x3f]
    %v75 = vld [vmem:[%s3 + $0x8] sm:$0x3f]
    %vm76 = vcmask 128000
    %v77 = vsel %vm76, %v74, 0.0
    %v78 = vsel %vm76, %v75, 0.0
    %v79 = vadd.f32 %v77, %v78
    %80 = vadd.xlane.f32.xlu0 %v79
    %v81 = vpop.xlane.xlu0 %80
    %v82 = vrot.slane %v81, 4
    %v83 = vadd.f32 %v81, %v82
    %v84 = vrot.slane %v83, 2
    %v85 = vadd.f32 %v83, %v84
    %v86 = vrot.slane %v85, 1
    %v87 = vadd.f32 %v85, %v86
    %s88 = vtos %v87
    %v89 = vstv %s88
    %v90 = vadd.f32 %v73, %v89
    %91 = vst.msk [vmem:[#allocation4] sm:$0x1] %vm39, %v90
    // Predicated region
    $region18: #{tpu_custom_call.1} parent=1 // pred_check
      _
    $region19: #{tpu_custom_call.1} parent=1 // pred_check_branch
      %93 = sbr.rel (0) target = $region21
    $region20: #{tpu_custom_call.1} parent=1 // pred_region
      %s95 = ssub.s32 16, 16
      %96 = vsyncadd [#allocation3], %s95
      %s98 = sshll.u32 [#allocation2], 4
      %s99 = int_to_ptr.vmem [resolvable:$true] %s98
      %101 = dma.vmem_to_hbm [thread:$0]  %s99, 16, %s4, [#allocation3]
    $region21: #{tpu_custom_call.1} parent=1 // pred_fallthru
      _
    // Predicated region
    $region22: #{tpu_custom_call.1} parent=1 // pred_check
      _
    $region23: #{tpu_custom_call.1} parent=1 // pred_check_branch
      %103 = sbr.rel (0) target = $region25
    $region24: #{tpu_custom_call.1} parent=1 // pred_region
      %s105 = ssub.s32 16, 16
      %106 = vsyncadd [#allocation5], %s105
      %s108 = sshll.u32 [#allocation4], 4
      %s109 = int_to_ptr.vmem [resolvable:$true] %s108
      %111 = dma.vmem_to_hbm [thread:$0]  %s109, 16, %s5, [#allocation5]
    $region25: #{tpu_custom_call.1} parent=1 // pred_fallthru
      _
    // Predicated region
    $region26: #{tpu_custom_call.1} parent=1 // pred_check
      _
    $region27: #{tpu_custom_call.1} parent=1 // pred_check_branch
      %113 = sbr.rel (0) target = $region29
    $region28: #{tpu_custom_call.1} parent=1 // pred_region
      %114 = dma.done [#allocation3], 16
    $region29: #{tpu_custom_call.1} parent=1 // pred_fallthru
      _
    // Predicated region
    $region30: #{tpu_custom_call.1} parent=1 // pred_check
      _
    $region31: #{tpu_custom_call.1} parent=1 // pred_check_branch
      %116 = sbr.rel (0) target = $region33
    $region32: #{tpu_custom_call.1} parent=1 // pred_region
      %117 = dma.done [#allocation5], 16
    $region33: #{tpu_custom_call.1} parent=1 // pred_fallthru
      _
    %118 = vsyncpa [#allocation3], 1
    %119 = vsyncpa [#allocation5], 1

</llo_original>
